<compile_context>
chip_gen: v7x
topology: tpu7x:2x2x1
jax: 0.10.0
libtpu: 0.0.40
codegen_flags: <defaults>
</compile_context>

<pallas_src>
import functools

import jax
import jax.numpy as jnp
import numpy as np
from jax import lax
from jax.experimental import pallas as pl
from jax.experimental.pallas import tpu as pltpu


def _round_up(n, m):
    return (n + m - 1) // m * m


def _leaky_relu(v, slope=0.01):
    return jnp.where(v >= 0, v, slope * v)


def myrnn_kernel(x_ref, w_ref, b_ref, out_ref, *, seq_len, batch_p, out_valid):
    """Single-invocation kernel; all operands lane-dense and VMEM-resident.

    x_ref   : (seq_len*batch_p, P) f32   zero-padded input, flattened over time
    w_ref   : (5, P, P)          bf16    packed transposed weights:
                                         [W_ih^T, W_hh^T, W_h0^T, W_h1^T, W_out^T]
    b_ref   : (4, P)             f32     packed biases:
                                         [b_ih + b_hh, b_h0, b_h1, b_out]
    out_ref : (batch_p, P)       f32     log_softmax output (pad lanes masked)
    """
    # ---- Input projection for ALL timesteps: one bf16 MXU matmul (f32 acc),
    #      folded RNN bias added once.  Kept vreg-resident (no VMEM scratch).
    xproj = (jnp.dot(x_ref[...].astype(jnp.bfloat16), w_ref[0],
                     preferred_element_type=jnp.float32)
             + b_ref[0:1, :])

    w_hh = w_ref[1]                                   # (P, P) bf16, held in vregs
    p = w_hh.shape[1]
    h = jnp.zeros((batch_p, p), jnp.float32)

    # ---- Serial tanh recurrence: h_t = tanh(xproj[t] + h_{t-1} @ W_hh^T).
    #      Fully unrolled (static seq_len); each timestep slab is exactly one
    #      tile-aligned (8,128) f32 vreg slice of the vreg-resident xproj.
    for t in range(seq_len):
        slab = xproj[t * batch_p:(t + 1) * batch_p, :]
        pre = slab + jnp.dot(h.astype(jnp.bfloat16), w_hh,
                             preferred_element_type=jnp.float32)
        h = jnp.tanh(pre)

    # ---- MLP head: bf16 MXU operands, f32 accumulate + f32 elementwise.
    #      Weights/biases loaded at use sites to bound vreg live ranges.
    o = _leaky_relu(jnp.dot(h.astype(jnp.bfloat16), w_ref[2],
                            preferred_element_type=jnp.float32) + b_ref[1:2, :])
    o = _leaky_relu(jnp.dot(o.astype(jnp.bfloat16), w_ref[3],
                            preferred_element_type=jnp.float32) + b_ref[2:3, :])
    o = _leaky_relu(jnp.dot(o.astype(jnp.bfloat16), w_ref[4],
                            preferred_element_type=jnp.float32) + b_ref[3:4, :])

    # ---- log_softmax over the VALID output lanes only (mask pad lanes). ----
    lane = lax.broadcasted_iota(jnp.int32, o.shape, 1)
    o = jnp.where(lane < out_valid, o, -1e30)
    m = jnp.max(o, axis=-1, keepdims=True)
    s = o - m
    lse = jnp.log(jnp.sum(jnp.exp(s), axis=-1, keepdims=True))
    out_ref[...] = s - lse                            # (8,128) lane-dense unmasked vst


def prepare_params(params):
    """One-time glue: transpose, fold RNN biases, zero-pad, pack, cast to bf16."""
    hidden = params["w_hh"].shape[0]
    input_size = params["w_ih"].shape[1]
    output = params["w_out"].shape[0]
    P = max(_round_up(hidden, 128), _round_up(input_size, 128),
            _round_up(output, 128))

    def pad_t(w):                         # torch (out, in) layout -> padded (P, P) of W^T
        wt = w.T
        return jnp.pad(wt, ((0, P - wt.shape[0]), (0, P - wt.shape[1])))

    def pad_b(b):
        return jnp.pad(b.reshape(1, -1), ((0, 0), (0, P - b.shape[0])))

    w_packed = jnp.stack(
        [pad_t(params["w_ih"]), pad_t(params["w_hh"]),
         pad_t(params["w_h0"]), pad_t(params["w_h1"]),
         pad_t(params["w_out"])], axis=0).astype(jnp.bfloat16)   # (5, P, P) bf16

    b_packed = jnp.concatenate(
        [pad_b(params["b_ih"] + params["b_hh"]),                  # folded once
         pad_b(params["b_h0"]), pad_b(params["b_h1"]),
         pad_b(params["b_out"])], axis=0).astype(jnp.float32)     # (4, P) f32

    return {"w_packed": w_packed, "b_packed": b_packed,
            "dims": (input_size, hidden, output, P)}


def make_forward(prepped, seq_len, batch):
    input_size, hidden, output, P = prepped["dims"]
    bp = _round_up(batch, 8)

    kernel = functools.partial(
        myrnn_kernel, seq_len=seq_len, batch_p=bp, out_valid=output)
    vmem = pl.BlockSpec(memory_space=pltpu.MemorySpace.VMEM)

    call = pl.pallas_call(
        kernel,
        out_shape=jax.ShapeDtypeStruct((bp, P), jnp.float32),
        in_specs=[vmem, vmem, vmem],
        out_specs=vmem,
    )

    def fwd(x):
        # (seq, batch, input) -> zero-pad to (seq, bp, P) -> flatten to (seq*bp, P)
        xp = jnp.pad(x, ((0, 0), (0, bp - batch), (0, P - input_size)))
        xp = xp.reshape(seq_len * bp, P)
        out_p = call(xp, prepped["w_packed"], prepped["b_packed"])
        return out_p[:batch, :output]

    return jax.jit(fwd)


def init_params(key, input_size, hidden_size, output_size):
    """Deterministic init mimicking PyTorch's U(-1/sqrt(fan), 1/sqrt(fan))."""
    ks = jax.random.split(key, 10)

    def u(k, shape, fan):
        bound = 1.0 / (fan ** 0.5)
        return jax.random.uniform(k, shape, jnp.float32, -bound, bound)

    return {
        # nn.RNN(input_size, hidden_size)
        "w_ih": u(ks[0], (hidden_size, input_size), hidden_size),
        "w_hh": u(ks[1], (hidden_size, hidden_size), hidden_size),
        "b_ih": u(ks[2], (hidden_size,), hidden_size),
        "b_hh": u(ks[3], (hidden_size,), hidden_size),
        # hidden_to_hidden_0 / _1
        "w_h0": u(ks[4], (hidden_size, hidden_size), hidden_size),
        "b_h0": u(ks[5], (hidden_size,), hidden_size),
        "w_h1": u(ks[6], (hidden_size, hidden_size), hidden_size),
        "b_h1": u(ks[7], (hidden_size,), hidden_size),
        # hidden_to_output
        "w_out": u(ks[8], (output_size, hidden_size), hidden_size),
        "b_out": u(ks[9], (output_size,), hidden_size),
    }


def reference_forward(x, params):
    """Pure-JAX f32 reference matching the PyTorch module."""
    seq_len, batch, _ = x.shape
    h = jnp.zeros((batch, params["w_hh"].shape[0]), jnp.float32)
    for t in range(seq_len):
        h = jnp.tanh(x[t] @ params["w_ih"].T + params["b_ih"]
                     + h @ params["w_hh"].T + params["b_hh"])
    lrelu = lambda v: jnp.where(v >= 0, v, 0.01 * v)
    o = lrelu(h @ params["w_h0"].T + params["b_h0"])
    o = lrelu(o @ params["w_h1"].T + params["b_h1"])
    o = lrelu(o @ params["w_out"].T + params["b_out"])
    return jax.nn.log_softmax(o, axis=1)


if __name__ == "__main__":
    seq_len, batch, input_size, hidden_size, output_size = 8, 2, 16, 32, 8

    key = jax.random.PRNGKey(0)
    k_x, k_p = jax.random.split(key)
    x = jax.random.normal(k_x, (seq_len, batch, input_size), jnp.float32)
    params = init_params(k_p, input_size, hidden_size, output_size)

    prepped = prepare_params(params)          # one-time transpose/fold/pad/pack (bf16)
    forward = make_forward(prepped, seq_len, batch)

    out = forward(x)
    out = jax.block_until_ready(out)
    assert out.shape == (batch, output_size)

    ref = jax.block_until_ready(reference_forward(x, params))
    max_diff = float(np.max(np.abs(np.asarray(out) - np.asarray(ref))))
    # Tolerance loosened vs f32 reference because MXU operands are bf16
    # (f32 accumulate); elementwise math stays f32.
    assert max_diff < 5e-2, f"mismatch vs reference: {max_diff}"

    print("KERNEL_OK")
</pallas_src>

<mosaic_0001>
module attributes {stable_mosaic.version = 11 : i64} {
  func.func @myrnn_kernel(%arg0: memref<64x128xf32, #tpu.memory_space<vmem>>, %arg1: memref<5x128x128xbf16, #tpu.memory_space<vmem>>, %arg2: memref<4x128xf32, #tpu.memory_space<vmem>>, %arg3: memref<8x128xf32, #tpu.memory_space<vmem>>) attributes {dimension_semantics = [], scalar_prefetch = 0 : i64, scratch_operands = 0 : i64, tpu.core_type = #tpu.core_type<tc>} {
    %c0 = arith.constant 0 : index
    %c0_0 = arith.constant 0 : index
    %0 = vector.load %arg0[%c0, %c0_0] : memref<64x128xf32, #tpu.memory_space<vmem>>, vector<64x128xf32>
    %1 = arith.truncf %0 : vector<64x128xf32> to vector<64x128xbf16>
    %c0_1 = arith.constant 0 : index
    %c0_2 = arith.constant 0 : index
    %c0_3 = arith.constant 0 : index
    %2 = vector.load %arg1[%c0_1, %c0_2, %c0_3] : memref<5x128x128xbf16, #tpu.memory_space<vmem>>, vector<1x128x128xbf16>
    %3 = vector.shape_cast %2 : vector<1x128x128xbf16> to vector<128x128xbf16>
    %cst = arith.constant dense<0.000000e+00> : vector<64x128xf32>
    %4 = tpu.matmul %1, %3, %cst {dimension_numbers = #tpu.dot_dimension_numbers<[1], [0], [0], [1], [0, 0, 1, 1], [], []>} : vector<64x128xbf16>, vector<128x128xbf16>, vector<64x128xf32> -> vector<64x128xf32>
    %c0_4 = arith.constant 0 : index
    %c0_5 = arith.constant 0 : index
    %5 = vector.load %arg2[%c0_4, %c0_5] : memref<4x128xf32, #tpu.memory_space<vmem>>, vector<1x128xf32>
    %6 = vector.broadcast %5 : vector<1x128xf32> to vector<64x128xf32>
    %7 = arith.addf %4, %6 : vector<64x128xf32>
    %c1 = arith.constant 1 : index
    %c0_6 = arith.constant 0 : index
    %c0_7 = arith.constant 0 : index
    %8 = vector.load %arg1[%c1, %c0_6, %c0_7] : memref<5x128x128xbf16, #tpu.memory_space<vmem>>, vector<1x128x128xbf16>
    %9 = vector.shape_cast %8 : vector<1x128x128xbf16> to vector<128x128xbf16>
    %cst_8 = arith.constant 0.000000e+00 : f32
    %10 = vector.broadcast %cst_8 : f32 to vector<8x128xf32>
    %11 = vector.extract_strided_slice %7 {offsets = [0, 0], sizes = [8, 128], strides = [1, 1]} : vector<64x128xf32> to vector<8x128xf32>
    %12 = arith.truncf %10 : vector<8x128xf32> to vector<8x128xbf16>
    %cst_9 = arith.constant dense<0.000000e+00> : vector<8x128xf32>
    %13 = tpu.matmul %12, %9, %cst_9 {dimension_numbers = #tpu.dot_dimension_numbers<[1], [0], [0], [1], [0, 0, 1, 1], [], []>} : vector<8x128xbf16>, vector<128x128xbf16>, vector<8x128xf32> -> vector<8x128xf32>
    %14 = arith.addf %11, %13 : vector<8x128xf32>
    %15 = math.tanh %14 : vector<8x128xf32>
    %16 = vector.extract_strided_slice %7 {offsets = [8, 0], sizes = [8, 128], strides = [1, 1]} : vector<64x128xf32> to vector<8x128xf32>
    %17 = arith.truncf %15 : vector<8x128xf32> to vector<8x128xbf16>
    %cst_10 = arith.constant dense<0.000000e+00> : vector<8x128xf32>
    %18 = tpu.matmul %17, %9, %cst_10 {dimension_numbers = #tpu.dot_dimension_numbers<[1], [0], [0], [1], [0, 0, 1, 1], [], []>} : vector<8x128xbf16>, vector<128x128xbf16>, vector<8x128xf32> -> vector<8x128xf32>
    %19 = arith.addf %16, %18 : vector<8x128xf32>
    %20 = math.tanh %19 : vector<8x128xf32>
    %21 = vector.extract_strided_slice %7 {offsets = [16, 0], sizes = [8, 128], strides = [1, 1]} : vector<64x128xf32> to vector<8x128xf32>
    %22 = arith.truncf %20 : vector<8x128xf32> to vector<8x128xbf16>
    %cst_11 = arith.constant dense<0.000000e+00> : vector<8x128xf32>
    %23 = tpu.matmul %22, %9, %cst_11 {dimension_numbers = #tpu.dot_dimension_numbers<[1], [0], [0], [1], [0, 0, 1, 1], [], []>} : vector<8x128xbf16>, vector<128x128xbf16>, vector<8x128xf32> -> vector<8x128xf32>
    %24 = arith.addf %21, %23 : vector<8x128xf32>
    %25 = math.tanh %24 : vector<8x128xf32>
    %26 = vector.extract_strided_slice %7 {offsets = [24, 0], sizes = [8, 128], strides = [1, 1]} : vector<64x128xf32> to vector<8x128xf32>
    %27 = arith.truncf %25 : vector<8x128xf32> to vector<8x128xbf16>
    %cst_12 = arith.constant dense<0.000000e+00> : vector<8x128xf32>
    %28 = tpu.matmul %27, %9, %cst_12 {dimension_numbers = #tpu.dot_dimension_numbers<[1], [0], [0], [1], [0, 0, 1, 1], [], []>} : vector<8x128xbf16>, vector<128x128xbf16>, vector<8x128xf32> -> vector<8x128xf32>
    %29 = arith.addf %26, %28 : vector<8x128xf32>
    %30 = math.tanh %29 : vector<8x128xf32>
    %31 = vector.extract_strided_slice %7 {offsets = [32, 0], sizes = [8, 128], strides = [1, 1]} : vector<64x128xf32> to vector<8x128xf32>
    %32 = arith.truncf %30 : vector<8x128xf32> to vector<8x128xbf16>
    %cst_13 = arith.constant dense<0.000000e+00> : vector<8x128xf32>
    %33 = tpu.matmul %32, %9, %cst_13 {dimension_numbers = #tpu.dot_dimension_numbers<[1], [0], [0], [1], [0, 0, 1, 1], [], []>} : vector<8x128xbf16>, vector<128x128xbf16>, vector<8x128xf32> -> vector<8x128xf32>
    %34 = arith.addf %31, %33 : vector<8x128xf32>
    %35 = math.tanh %34 : vector<8x128xf32>
    %36 = vector.extract_strided_slice %7 {offsets = [40, 0], sizes = [8, 128], strides = [1, 1]} : vector<64x128xf32> to vector<8x128xf32>
    %37 = arith.truncf %35 : vector<8x128xf32> to vector<8x128xbf16>
    %cst_14 = arith.constant dense<0.000000e+00> : vector<8x128xf32>
    %38 = tpu.matmul %37, %9, %cst_14 {dimension_numbers = #tpu.dot_dimension_numbers<[1], [0], [0], [1], [0, 0, 1, 1], [], []>} : vector<8x128xbf16>, vector<128x128xbf16>, vector<8x128xf32> -> vector<8x128xf32>
    %39 = arith.addf %36, %38 : vector<8x128xf32>
    %40 = math.tanh %39 : vector<8x128xf32>
    %41 = vector.extract_strided_slice %7 {offsets = [48, 0], sizes = [8, 128], strides = [1, 1]} : vector<64x128xf32> to vector<8x128xf32>
    %42 = arith.truncf %40 : vector<8x128xf32> to vector<8x128xbf16>
    %cst_15 = arith.constant dense<0.000000e+00> : vector<8x128xf32>
    %43 = tpu.matmul %42, %9, %cst_15 {dimension_numbers = #tpu.dot_dimension_numbers<[1], [0], [0], [1], [0, 0, 1, 1], [], []>} : vector<8x128xbf16>, vector<128x128xbf16>, vector<8x128xf32> -> vector<8x128xf32>
    %44 = arith.addf %41, %43 : vector<8x128xf32>
    %45 = math.tanh %44 : vector<8x128xf32>
    %46 = vector.extract_strided_slice %7 {offsets = [56, 0], sizes = [8, 128], strides = [1, 1]} : vector<64x128xf32> to vector<8x128xf32>
    %47 = arith.truncf %45 : vector<8x128xf32> to vector<8x128xbf16>
    %cst_16 = arith.constant dense<0.000000e+00> : vector<8x128xf32>
    %48 = tpu.matmul %47, %9, %cst_16 {dimension_numbers = #tpu.dot_dimension_numbers<[1], [0], [0], [1], [0, 0, 1, 1], [], []>} : vector<8x128xbf16>, vector<128x128xbf16>, vector<8x128xf32> -> vector<8x128xf32>
    %49 = arith.addf %46, %48 : vector<8x128xf32>
    %50 = math.tanh %49 : vector<8x128xf32>
    %51 = arith.truncf %50 : vector<8x128xf32> to vector<8x128xbf16>
    %c2 = arith.constant 2 : index
    %c0_17 = arith.constant 0 : index
    %c0_18 = arith.constant 0 : index
    %52 = vector.load %arg1[%c2, %c0_17, %c0_18] : memref<5x128x128xbf16, #tpu.memory_space<vmem>>, vector<1x128x128xbf16>
    %53 = vector.shape_cast %52 : vector<1x128x128xbf16> to vector<128x128xbf16>
    %cst_19 = arith.constant dense<0.000000e+00> : vector<8x128xf32>
    %54 = tpu.matmul %51, %53, %cst_19 {dimension_numbers = #tpu.dot_dimension_numbers<[1], [0], [0], [1], [0, 0, 1, 1], [], []>} : vector<8x128xbf16>, vector<128x128xbf16>, vector<8x128xf32> -> vector<8x128xf32>
    %c1_20 = arith.constant 1 : index
    %c0_21 = arith.constant 0 : index
    %55 = vector.load %arg2[%c1_20, %c0_21] : memref<4x128xf32, #tpu.memory_space<vmem>>, vector<1x128xf32>
    %56 = vector.broadcast %55 : vector<1x128xf32> to vector<8x128xf32>
    %57 = arith.addf %54, %56 : vector<8x128xf32>
    %cst_22 = arith.constant 0.000000e+00 : f32
    %58 = vector.broadcast %cst_22 : f32 to vector<8x128xf32>
    %59 = arith.cmpf oge, %57, %58 : vector<8x128xf32>
    %cst_23 = arith.constant 0.00999999977 : f32
    %60 = vector.broadcast %cst_23 : f32 to vector<8x128xf32>
    %61 = arith.mulf %60, %57 : vector<8x128xf32>
    %62 = arith.select %59, %57, %61 : vector<8x128xi1>, vector<8x128xf32>
    %63 = arith.truncf %62 : vector<8x128xf32> to vector<8x128xbf16>
    %c3 = arith.constant 3 : index
    %c0_24 = arith.constant 0 : index
    %c0_25 = arith.constant 0 : index
    %64 = vector.load %arg1[%c3, %c0_24, %c0_25] : memref<5x128x128xbf16, #tpu.memory_space<vmem>>, vector<1x128x128xbf16>
    %65 = vector.shape_cast %64 : vector<1x128x128xbf16> to vector<128x128xbf16>
    %cst_26 = arith.constant dense<0.000000e+00> : vector<8x128xf32>
    %66 = tpu.matmul %63, %65, %cst_26 {dimension_numbers = #tpu.dot_dimension_numbers<[1], [0], [0], [1], [0, 0, 1, 1], [], []>} : vector<8x128xbf16>, vector<128x128xbf16>, vector<8x128xf32> -> vector<8x128xf32>
    %c2_27 = arith.constant 2 : index
    %c0_28 = arith.constant 0 : index
    %67 = vector.load %arg2[%c2_27, %c0_28] : memref<4x128xf32, #tpu.memory_space<vmem>>, vector<1x128xf32>
    %68 = vector.broadcast %67 : vector<1x128xf32> to vector<8x128xf32>
    %69 = arith.addf %66, %68 : vector<8x128xf32>
    %cst_29 = arith.constant 0.000000e+00 : f32
    %70 = vector.broadcast %cst_29 : f32 to vector<8x128xf32>
    %71 = arith.cmpf oge, %69, %70 : vector<8x128xf32>
    %cst_30 = arith.constant 0.00999999977 : f32
    %72 = vector.broadcast %cst_30 : f32 to vector<8x128xf32>
    %73 = arith.mulf %72, %69 : vector<8x128xf32>
    %74 = arith.select %71, %69, %73 : vector<8x128xi1>, vector<8x128xf32>
    %75 = arith.truncf %74 : vector<8x128xf32> to vector<8x128xbf16>
    %c4 = arith.constant 4 : index
    %c0_31 = arith.constant 0 : index
    %c0_32 = arith.constant 0 : index
    %76 = vector.load %arg1[%c4, %c0_31, %c0_32] : memref<5x128x128xbf16, #tpu.memory_space<vmem>>, vector<1x128x128xbf16>
    %77 = vector.shape_cast %76 : vector<1x128x128xbf16> to vector<128x128xbf16>
    %cst_33 = arith.constant dense<0.000000e+00> : vector<8x128xf32>
    %78 = tpu.matmul %75, %77, %cst_33 {dimension_numbers = #tpu.dot_dimension_numbers<[1], [0], [0], [1], [0, 0, 1, 1], [], []>} : vector<8x128xbf16>, vector<128x128xbf16>, vector<8x128xf32> -> vector<8x128xf32>
    %c3_34 = arith.constant 3 : index
    %c0_35 = arith.constant 0 : index
    %79 = vector.load %arg2[%c3_34, %c0_35] : memref<4x128xf32, #tpu.memory_space<vmem>>, vector<1x128xf32>
    %80 = vector.broadcast %79 : vector<1x128xf32> to vector<8x128xf32>
    %81 = arith.addf %78, %80 : vector<8x128xf32>
    %cst_36 = arith.constant 0.000000e+00 : f32
    %82 = vector.broadcast %cst_36 : f32 to vector<8x128xf32>
    %83 = arith.cmpf oge, %81, %82 : vector<8x128xf32>
    %cst_37 = arith.constant 0.00999999977 : f32
    %84 = vector.broadcast %cst_37 : f32 to vector<8x128xf32>
    %85 = arith.mulf %84, %81 : vector<8x128xf32>
    %86 = arith.select %83, %81, %85 : vector<8x128xi1>, vector<8x128xf32>
    %87 = tpu.iota {dimensions = array<i32: 1>} : vector<8x128xi32>
    %c8_i32 = arith.constant 8 : i32
    %88 = vector.broadcast %c8_i32 : i32 to vector<8x128xi32>
    %89 = arith.cmpi slt, %87, %88 : vector<8x128xi32>
    %cst_38 = arith.constant -1.000000e+30 : f32
    %90 = vector.broadcast %cst_38 : f32 to vector<8x128xf32>
    %91 = arith.select %89, %86, %90 : vector<8x128xi1>, vector<8x128xf32>
    %cst_39 = arith.constant dense<0xFF800000> : vector<8xf32>
    %92 = vector.multi_reduction <maximumf>, %91, %cst_39 [1] : vector<8x128xf32> to vector<8xf32>
    %93 = vector.shape_cast %92 : vector<8xf32> to vector<8x1xf32>
    %94 = vector.broadcast %93 : vector<8x1xf32> to vector<8x128xf32>
    %95 = arith.subf %91, %94 : vector<8x128xf32>
    %96 = math.exp %95 : vector<8x128xf32>
    %cst_40 = arith.constant dense<0.000000e+00> : vector<8xf32>
    %97 = vector.multi_reduction <add>, %96, %cst_40 [1] : vector<8x128xf32> to vector<8xf32>
    %98 = vector.shape_cast %97 : vector<8xf32> to vector<8x1xf32>
    %99 = math.log %98 : vector<8x1xf32>
    %100 = vector.broadcast %99 : vector<8x1xf32> to vector<8x128xf32>
    %101 = arith.subf %95, %100 : vector<8x128xf32>
    %c0_41 = arith.constant 0 : index
    %c0_42 = arith.constant 0 : index
    %102 = vector.load %arg3[%c0_41, %c0_42] : memref<8x128xf32, #tpu.memory_space<vmem>>, vector<8x128xf32>
    tpu.vector_store %arg3[%c0_41, %c0_42], %101 {strides = array<i32>} : memref<8x128xf32, #tpu.memory_space<vmem>>, vector<8x128xf32>,
    return
  }
}

</mosaic_0001>

<llo_original>
// kernel: fwd.1
$region0: #{fwd.1}
  #allocation0 [shape = 'u32[]', space=smem, size = 0x4, offset = 0x4, fixed_abs, tag = 'smem constant byte address 0x4 - core index']
  #allocation1 [shape = 'u32[144,128]{1,0:T(1,128)}', space=vmem, size = 0x12000, scoped, tag = 'internal scratch']
  %s0 = inlined_call_operand.vmem [shape: f32[64,128], index: 0, kind: input, shape index: {}]
  %s1 = inlined_call_operand.hbm [shape: bf16[5,128,128], index: 1, kind: input, shape index: {}]
  %s2 = inlined_call_operand.vmem [shape: f32[4,128], index: 2, kind: input, shape index: {}]
  %s3 = inlined_call_operand.vmem [shape: f32[8,128], index: 3, kind: output, shape index: {}]
  %s4 = sld [smem:[#allocation0]]
  $region26: #{fwd.1} parent=0
    _
  %s6 = ssub.s32 1, %s4
  %s7 = scalar_select 0, %s6, %s4
  $region1: #{fwd.1} parent=0
    #allocation2 [shape = 'u8[163840]{0}', space=vmem, size = 0x28000, scoped, tag = 'input window, operand 1, single buffered']
    #allocation3 [shape = 's32[1]{0}', space=sflag, size = 0x4, scoped, tag = 'scoped memory for fwd.1']
    %8 = vsyncpa [#allocation3], 0
    // Predicated region
    $region2: #{fwd.1} parent=1 // pred_check
      _
    $region3: #{fwd.1} parent=1 // pred_check_branch
      %10 = sbr.rel (0) target = $region5
    $region4: #{fwd.1} parent=1 // pred_region
      _
    $region5: #{fwd.1} parent=1 // pred_fallthru
      _
    // Predicated region
    $region6: #{fwd.1} parent=1 // pred_check
      _
    $region7: #{fwd.1} parent=1 // pred_check_branch
      %12 = sbr.rel (0) target = $region9
    $region8: #{fwd.1} parent=1 // pred_region
      %s14 = ssub.s32 5120, 5120
      %15 = vsyncadd [#allocation3], %s14
      %s16 = sshll.u32 [#allocation2], 4
      %s17 = int_to_ptr.vmem [resolvable:$true] %s16
      %22 = dma.hbm_to_vmem [thread:$0]  %s1, 5120, %s17, [#allocation3], 64, 64, 4
    $region9: #{fwd.1} parent=1 // pred_fallthru
      _
    // Predicated region
    $region10: #{fwd.1} parent=1 // pred_check
      _
    $region11: #{fwd.1} parent=1 // pred_check_branch
      %24 = sbr.rel (0) target = $region13
    $region12: #{fwd.1} parent=1 // pred_region
      _
    $region13: #{fwd.1} parent=1 // pred_fallthru
      _
    // Predicated region
    $region14: #{fwd.1} parent=1 // pred_check
      _
    $region15: #{fwd.1} parent=1 // pred_check_branch
      %26 = sbr.rel (0) target = $region17
    $region16: #{fwd.1} parent=1 // pred_region
      %27 = dma.done [#allocation3], 5120
    $region17: #{fwd.1} parent=1 // pred_fallthru
      _
    %v29 = vld [vmem:[%s0] sm:$0xff]
    %v30 = vld [vmem:[%s0 + $0x8] sm:$0xff]
    %v31 = vld [vmem:[%s0 + $0x10] sm:$0xff]
    %v32 = vld [vmem:[%s0 + $0x18] sm:$0xff]
    %v33 = vld [vmem:[%s0 + $0x20] sm:$0xff]
    %v34 = vld [vmem:[%s0 + $0x28] sm:$0xff]
    %v35 = vld [vmem:[%s0 + $0x30] sm:$0xff]
    %v36 = vld [vmem:[%s0 + $0x38] sm:$0xff]
    %v37 = vpack.c.bf16 %v30, %v29
    %v38 = vpack.c.bf16 %v32, %v31
    %v39 = vpack.c.bf16 %v34, %v33
    %v40 = vpack.c.bf16 %v36, %v35
    %v41 = vld [vmem:[#allocation2] sm:$0xf]
    %v42 = vld [vmem:[#allocation2 + $0x4] sm:$0xf]
    %v43 = vld [vmem:[#allocation2 + $0x8] sm:$0xf]
    %v44 = vld [vmem:[#allocation2 + $0xc] sm:$0xf]
    %v45 = vld [vmem:[#allocation2 + $0x10] sm:$0xf]
    %v46 = vld [vmem:[#allocation2 + $0x14] sm:$0xf]
    %v47 = vld [vmem:[#allocation2 + $0x18] sm:$0xf]
    %v48 = vld [vmem:[#allocation2 + $0x1c] sm:$0xf]
    %v49 = vld [vmem:[#allocation2 + $0x20] sm:$0xf]
    %v50 = vld [vmem:[#allocation2 + $0x24] sm:$0xf]
    %v51 = vld [vmem:[#allocation2 + $0x28] sm:$0xf]
    %v52 = vld [vmem:[#allocation2 + $0x2c] sm:$0xf]
    %v53 = vld [vmem:[#allocation2 + $0x30] sm:$0xf]
    %v54 = vld [vmem:[#allocation2 + $0x34] sm:$0xf]
    %v55 = vld [vmem:[#allocation2 + $0x38] sm:$0xf]
    %v56 = vld [vmem:[#allocation2 + $0x3c] sm:$0xf]
    %v57 = vld [vmem:[%s2] sm:$0x1]
    %v58 = vlaneseq
    %v59 = vshrl.u32 %v58, 7
    %v60 = vsub.s32 0, %v59
    %v61 = vrot.slane %v57, %v60
    %v78 = vunpack.c.l.b16 %v41
    %v79 = vunpack.c.l.b16 %v42
    %v80 = vunpack.c.l.b16 %v43
    %v81 = vunpack.c.l.b16 %v44
    %v82 = vunpack.c.l.b16 %v45
    %v83 = vunpack.c.l.b16 %v46
    %v84 = vunpack.c.l.b16 %v47
    %v85 = vunpack.c.l.b16 %v48
    %v86 = vunpack.c.l.b16 %v49
    %v87 = vunpack.c.l.b16 %v50
    %v88 = vunpack.c.l.b16 %v51
    %v89 = vunpack.c.l.b16 %v52
    %v90 = vunpack.c.l.b16 %v53
    %v91 = vunpack.c.l.b16 %v54
    %v92 = vunpack.c.l.b16 %v55
    %v93 = vunpack.c.l.b16 %v56
    %v94 = vpack.c.b16 %v79, %v78
    %v95 = vpack.c.b16 %v81, %v80
    %v96 = vpack.c.b16 %v83, %v82
    %v97 = vpack.c.b16 %v85, %v84
    %v98 = vpack.c.b16 %v87, %v86
    %v99 = vpack.c.b16 %v89, %v88
    %v100 = vpack.c.b16 %v91, %v90
    %v101 = vpack.c.b16 %v93, %v92
    %110 = vmatprep.subr.bf16.mxu0 0
    %111 = vmatpush1.bf16.msra.mxu0 %v94
    %112 = vmatprep.subr.bf16.mxu0 0
    %113 = vmatpush1.bf16.msra.mxu0 %v95
    %114 = vmatprep.subr.bf16.mxu0 0
    %115 = vmatpush1.bf16.msra.mxu0 %v96
    %116 = vmatprep.subr.bf16.mxu0 0
    %117 = vmatpush1.bf16.msra.mxu0 %v97
    %118 = vmatprep.subr.bf16.mxu0 0
    %119 = vmatpush1.bf16.msra.mxu0 %v98
    %120 = vmatprep.subr.bf16.mxu0 0
    %121 = vmatpush1.bf16.msra.mxu0 %v99
    %122 = vmatprep.subr.bf16.mxu0 0
    %123 = vmatpush1.bf16.msra.mxu0 %v100
    %124 = vmatprep.subr.bf16.mxu0 0
    %125 = vmatpush1.bf16.msra.mxu0 %v101
    %126 = vmatprep.subr.bf16.mxu0 0
    %127 = vmatpush1.bf16.msra.mxu0 0
    %128 = vmatprep.subr.bf16.mxu0 0
    %129 = vmatpush1.bf16.msra.mxu0 0
    %130 = vmatprep.subr.bf16.mxu0 0
    %131 = vmatpush1.bf16.msra.mxu0 0
    %132 = vmatprep.subr.bf16.mxu0 0
    %133 = vmatpush1.bf16.msra.mxu0 0
    %134 = vmatprep.subr.bf16.mxu0 0
    %135 = vmatpush1.bf16.msra.mxu0 0
    %136 = vmatprep.subr.bf16.mxu0 0
    %137 = vmatpush1.bf16.msra.mxu0 0
    %138 = vmatprep.subr.bf16.mxu0 0
    %139 = vmatpush1.bf16.msra.mxu0 0
    %140 = vmatprep.subr.bf16.mxu0 0
    %141 = vmatpush1.bf16.msra.mxu0 0
    %142 = vmatprep.mubr.bf16.mxu0 0
    %143 = vmatmul.mubr.bf16.gmra.mrb[0].mxu0 %v37
    %v144 = vpop.f32.mrb[0].mxu0
    %v145 = vadd.f32 %v61, %v144
    %v146 = vpop.f32.mrb[0].mxu0
    %v147 = vpop.f32.mrb[0].mxu0
    %v148 = vadd.f32 %v61, %v147
    %v149 = vpop.f32.mrb[0].mxu0
    %150 = vmatprep.mubr.bf16.mxu0 0
    %151 = vmatmul.mubr.bf16.gmra.mrb[0].mxu0 %v38
    %v152 = vpop.f32.mrb[0].mxu0
    %v153 = vadd.f32 %v61, %v152
    %v154 = vpop.f32.mrb[0].mxu0
    %v155 = vpop.f32.mrb[0].mxu0
    %v156 = vadd.f32 %v61, %v155
    %v157 = vpop.f32.mrb[0].mxu0
    %158 = vmatprep.mubr.bf16.mxu0 0
    %159 = vmatmul.mubr.bf16.gmra.mrb[0].mxu0 %v39
    %v160 = vpop.f32.mrb[0].mxu0
    %v161 = vadd.f32 %v61, %v160
    %v162 = vpop.f32.mrb[0].mxu0
    %v163 = vpop.f32.mrb[0].mxu0
    %v164 = vadd.f32 %v61, %v163
    %v165 = vpop.f32.mrb[0].mxu0
    %166 = vmatprep.mubr.bf16.mxu0 0
    %167 = vmatmul.mubr.bf16.gmra.mrb[0].mxu0 %v40
    %v168 = vpop.f32.mrb[0].mxu0
    %v169 = vadd.f32 %v61, %v168
    %v170 = vpop.f32.mrb[0].mxu0
    %v171 = vpop.f32.mrb[0].mxu0
    %v172 = vadd.f32 %v61, %v171
    %v173 = vpop.f32.mrb[0].mxu0
    %174 = vdwg.mxu0
    %s175 = scalar_lea.vmem [#allocation2], 64
    %v176 = vld [vmem:[%s175] sm:$0xf]
    %v177 = vld [vmem:[%s175 + $0x4] sm:$0xf]
    %v178 = vld [vmem:[%s175 + $0x8] sm:$0xf]
    %v179 = vld [vmem:[%s175 + $0xc] sm:$0xf]
    %v180 = vld [vmem:[%s175 + $0x10] sm:$0xf]
    %v181 = vld [vmem:[%s175 + $0x14] sm:$0xf]
    %v182 = vld [vmem:[%s175 + $0x18] sm:$0xf]
    %v183 = vld [vmem:[%s175 + $0x1c] sm:$0xf]
    %v184 = vld [vmem:[%s175 + $0x20] sm:$0xf]
    %v185 = vld [vmem:[%s175 + $0x24] sm:$0xf]
    %v186 = vld [vmem:[%s175 + $0x28] sm:$0xf]
    %v187 = vld [vmem:[%s175 + $0x2c] sm:$0xf]
    %v188 = vld [vmem:[%s175 + $0x30] sm:$0xf]
    %v189 = vld [vmem:[%s175 + $0x34] sm:$0xf]
    %v190 = vld [vmem:[%s175 + $0x38] sm:$0xf]
    %v191 = vld [vmem:[%s175 + $0x3c] sm:$0xf]
    %v208 = vunpack.c.l.b16 %v176
    %v209 = vunpack.c.l.b16 %v177
    %v210 = vunpack.c.l.b16 %v178
    %v211 = vunpack.c.l.b16 %v179
    %v212 = vunpack.c.l.b16 %v180
    %v213 = vunpack.c.l.b16 %v181
    %v214 = vunpack.c.l.b16 %v182
    %v215 = vunpack.c.l.b16 %v183
    %v216 = vunpack.c.l.b16 %v184
    %v217 = vunpack.c.l.b16 %v185
    %v218 = vunpack.c.l.b16 %v186
    %v219 = vunpack.c.l.b16 %v187
    %v220 = vunpack.c.l.b16 %v188
    %v221 = vunpack.c.l.b16 %v189
    %v222 = vunpack.c.l.b16 %v190
    %v223 = vunpack.c.l.b16 %v191
    %v224 = vpack.c.b16 %v209, %v208
    %v225 = vpack.c.b16 %v211, %v210
    %v226 = vpack.c.b16 %v213, %v212
    %v227 = vpack.c.b16 %v215, %v214
    %v228 = vpack.c.b16 %v217, %v216
    %v229 = vpack.c.b16 %v219, %v218
    %v230 = vpack.c.b16 %v221, %v220
    %v231 = vpack.c.b16 %v223, %v222
    %240 = vmatprep.subr.bf16.mxu0 0
    %241 = vmatpush1.bf16.msra.mxu0 %v224
    %242 = vmatprep.subr.bf16.mxu0 0
    %243 = vmatpush1.bf16.msra.mxu0 %v225
    %244 = vmatprep.subr.bf16.mxu0 0
    %245 = vmatpush1.bf16.msra.mxu0 %v226
    %246 = vmatprep.subr.bf16.mxu0 0
    %247 = vmatpush1.bf16.msra.mxu0 %v227
    %248 = vmatprep.subr.bf16.mxu0 0
    %249 = vmatpush1.bf16.msra.mxu0 %v228
    %250 = vmatprep.subr.bf16.mxu0 0
    %251 = vmatpush1.bf16.msra.mxu0 %v229
    %252 = vmatprep.subr.bf16.mxu0 0
    %253 = vmatpush1.bf16.msra.mxu0 %v230
    %254 = vmatprep.subr.bf16.mxu0 0
    %255 = vmatpush1.bf16.msra.mxu0 %v231
    %256 = vmatprep.subr.bf16.mxu0 0
    %257 = vmatpush1.bf16.msra.mxu0 0
    %258 = vmatprep.subr.bf16.mxu0 0
    %259 = vmatpush1.bf16.msra.mxu0 0
    %260 = vmatprep.subr.bf16.mxu0 0
    %261 = vmatpush1.bf16.msra.mxu0 0
    %262 = vmatprep.subr.bf16.mxu0 0
    %263 = vmatpush1.bf16.msra.mxu0 0
    %264 = vmatprep.subr.bf16.mxu0 0
    %265 = vmatpush1.bf16.msra.mxu0 0
    %266 = vmatprep.subr.bf16.mxu0 0
    %267 = vmatpush1.bf16.msra.mxu0 0
    %268 = vmatprep.subr.bf16.mxu0 0
    %269 = vmatpush1.bf16.msra.mxu0 0
    %270 = vmatprep.subr.bf16.mxu0 0
    %271 = vmatpush1.bf16.msra.mxu0 0
    %272 = vmatprep.mubr.bf16.mxu0 0
    %273 = vmatmul.mubr.bf16.gmra.mrb[0].mxu0 0
    %v274 = vpop.f32.mrb[0].mxu0
    %v275 = vadd.f32 0.0, %v274
    %v276 = vpop.f32.mrb[0].mxu0
    %v277 = vpop.f32.mrb[0].mxu0
    %v278 = vpop.f32.mrb[0].mxu0
    %279 = vdwg.mxu0
    %v280 = vadd.f32 %v145, %v275
    %v281 = vtanh.pop %v280
    %v282 = vpack.c.bf16 %v281, %v281
    %283 = vmatprep.subr.bf16.mxu0 0
    %284 = vmatpush1.bf16.msra.mxu0 %v224
    %285 = vmatprep.subr.bf16.mxu0 0
    %286 = vmatpush1.bf16.msra.mxu0 %v225
    %287 = vmatprep.subr.bf16.mxu0 0
    %288 = vmatpush1.bf16.msra.mxu0 %v226
    %289 = vmatprep.subr.bf16.mxu0 0
    %290 = vmatpush1.bf16.msra.mxu0 %v227
    %291 = vmatprep.subr.bf16.mxu0 0
    %292 = vmatpush1.bf16.msra.mxu0 %v228
    %293 = vmatprep.subr.bf16.mxu0 0
    %294 = vmatpush1.bf16.msra.mxu0 %v229
    %295 = vmatprep.subr.bf16.mxu0 0
    %296 = vmatpush1.bf16.msra.mxu0 %v230
    %297 = vmatprep.subr.bf16.mxu0 0
    %298 = vmatpush1.bf16.msra.mxu0 %v231
    %299 = vmatprep.subr.bf16.mxu0 0
    %300 = vmatpush1.bf16.msra.mxu0 0
    %301 = vmatprep.subr.bf16.mxu0 0
    %302 = vmatpush1.bf16.msra.mxu0 0
    %303 = vmatprep.subr.bf16.mxu0 0
    %304 = vmatpush1.bf16.msra.mxu0 0
    %305 = vmatprep.subr.bf16.mxu0 0
    %306 = vmatpush1.bf16.msra.mxu0 0
    %307 = vmatprep.subr.bf16.mxu0 0
    %308 = vmatpush1.bf16.msra.mxu0 0
    %309 = vmatprep.subr.bf16.mxu0 0
    %310 = vmatpush1.bf16.msra.mxu0 0
    %311 = vmatprep.subr.bf16.mxu0 0
    %312 = vmatpush1.bf16.msra.mxu0 0
    %313 = vmatprep.subr.bf16.mxu0 0
    %314 = vmatpush1.bf16.msra.mxu0 0
    %315 = vmatprep.mubr.bf16.mxu0 0
    %316 = vmatmul.mubr.bf16.gmra.mrb[0].mxu0 %v282
    %v317 = vpop.f32.mrb[0].mxu0
    %v318 = vadd.f32 0.0, %v317
    %v319 = vpop.f32.mrb[0].mxu0
    %v320 = vpop.f32.mrb[0].mxu0
    %v321 = vpop.f32.mrb[0].mxu0
    %322 = vdwg.mxu0
    %v323 = vadd.f32 %v148, %v318
    %v324 = vtanh.pop %v323
    %v325 = vpack.c.bf16 %v324, %v324
    %326 = vmatprep.subr.bf16.mxu0 0
    %327 = vmatpush1.bf16.msra.mxu0 %v224
    %328 = vmatprep.subr.bf16.mxu0 0
    %329 = vmatpush1.bf16.msra.mxu0 %v225
    %330 = vmatprep.subr.bf16.mxu0 0
    %331 = vmatpush1.bf16.msra.mxu0 %v226
    %332 = vmatprep.subr.bf16.mxu0 0
    %333 = vmatpush1.bf16.msra.mxu0 %v227
    %334 = vmatprep.subr.bf16.mxu0 0
    %335 = vmatpush1.bf16.msra.mxu0 %v228
    %336 = vmatprep.subr.bf16.mxu0 0
    %337 = vmatpush1.bf16.msra.mxu0 %v229
    %338 = vmatprep.subr.bf16.mxu0 0
    %339 = vmatpush1.bf16.msra.mxu0 %v230
    %340 = vmatprep.subr.bf16.mxu0 0
    %341 = vmatpush1.bf16.msra.mxu0 %v231
    %342 = vmatprep.subr.bf16.mxu0 0
    %343 = vmatpush1.bf16.msra.mxu0 0
    %344 = vmatprep.subr.bf16.mxu0 0
    %345 = vmatpush1.bf16.msra.mxu0 0
    %346 = vmatprep.subr.bf16.mxu0 0
    %347 = vmatpush1.bf16.msra.mxu0 0
    %348 = vmatprep.subr.bf16.mxu0 0
    %349 = vmatpush1.bf16.msra.mxu0 0
    %350 = vmatprep.subr.bf16.mxu0 0
    %351 = vmatpush1.bf16.msra.mxu0 0
    %352 = vmatprep.subr.bf16.mxu0 0
    %353 = vmatpush1.bf16.msra.mxu0 0
    %354 = vmatprep.subr.bf16.mxu0 0
    %355 = vmatpush1.bf16.msra.mxu0 0
    %356 = vmatprep.subr.bf16.mxu0 0
    %357 = vmatpush1.bf16.msra.mxu0 0
    %358 = vmatprep.mubr.bf16.mxu0 0
    %359 = vmatmul.mubr.bf16.gmra.mrb[0].mxu0 %v325
    %v360 = vpop.f32.mrb[0].mxu0
    %v361 = vadd.f32 0.0, %v360
    %v362 = vpop.f32.mrb[0].mxu0
    %v363 = vpop.f32.mrb[0].mxu0
    %v364 = vpop.f32.mrb[0].mxu0
    %365 = vdwg.mxu0
    %v366 = vadd.f32 %v153, %v361
    %v367 = vtanh.pop %v366
    %v368 = vpack.c.bf16 %v367, %v367
    %369 = vmatprep.subr.bf16.mxu0 0
    %370 = vmatpush1.bf16.msra.mxu0 %v224
    %371 = vmatprep.subr.bf16.mxu0 0
    %372 = vmatpush1.bf16.msra.mxu0 %v225
    %373 = vmatprep.subr.bf16.mxu0 0
    %374 = vmatpush1.bf16.msra.mxu0 %v226
    %375 = vmatprep.subr.bf16.mxu0 0
    %376 = vmatpush1.bf16.msra.mxu0 %v227
    %377 = vmatprep.subr.bf16.mxu0 0
    %378 = vmatpush1.bf16.msra.mxu0 %v228
    %379 = vmatprep.subr.bf16.mxu0 0
    %380 = vmatpush1.bf16.msra.mxu0 %v229
    %381 = vmatprep.subr.bf16.mxu0 0
    %382 = vmatpush1.bf16.msra.mxu0 %v230
    %383 = vmatprep.subr.bf16.mxu0 0
    %384 = vmatpush1.bf16.msra.mxu0 %v231
    %385 = vmatprep.subr.bf16.mxu0 0
    %386 = vmatpush1.bf16.msra.mxu0 0
    %387 = vmatprep.subr.bf16.mxu0 0
    %388 = vmatpush1.bf16.msra.mxu0 0
    %389 = vmatprep.subr.bf16.mxu0 0
    %390 = vmatpush1.bf16.msra.mxu0 0
    %391 = vmatprep.subr.bf16.mxu0 0
    %392 = vmatpush1.bf16.msra.mxu0 0
    %393 = vmatprep.subr.bf16.mxu0 0
    %394 = vmatpush1.bf16.msra.mxu0 0
    %395 = vmatprep.subr.bf16.mxu0 0
    %396 = vmatpush1.bf16.msra.mxu0 0
    %397 = vmatprep.subr.bf16.mxu0 0
    %398 = vmatpush1.bf16.msra.mxu0 0
    %399 = vmatprep.subr.bf16.mxu0 0
    %400 = vmatpush1.bf16.msra.mxu0 0
    %401 = vmatprep.mubr.bf16.mxu0 0
    %402 = vmatmul.mubr.bf16.gmra.mrb[0].mxu0 %v368
    %v403 = vpop.f32.mrb[0].mxu0
    %v404 = vadd.f32 0.0, %v403
    %v405 = vpop.f32.mrb[0].mxu0
    %v406 = vpop.f32.mrb[0].mxu0
    %v407 = vpop.f32.mrb[0].mxu0
    %408 = vdwg.mxu0
    %v409 = vadd.f32 %v156, %v404
    %v410 = vtanh.pop %v409
    %v411 = vpack.c.bf16 %v410, %v410
    %412 = vmatprep.subr.bf16.mxu0 0
    %413 = vmatpush1.bf16.msra.mxu0 %v224
    %414 = vmatprep.subr.bf16.mxu0 0
    %415 = vmatpush1.bf16.msra.mxu0 %v225
    %416 = vmatprep.subr.bf16.mxu0 0
    %417 = vmatpush1.bf16.msra.mxu0 %v226
    %418 = vmatprep.subr.bf16.mxu0 0
    %419 = vmatpush1.bf16.msra.mxu0 %v227
    %420 = vmatprep.subr.bf16.mxu0 0
    %421 = vmatpush1.bf16.msra.mxu0 %v228
    %422 = vmatprep.subr.bf16.mxu0 0
    %423 = vmatpush1.bf16.msra.mxu0 %v229
    %424 = vmatprep.subr.bf16.mxu0 0
    %425 = vmatpush1.bf16.msra.mxu0 %v230
    %426 = vmatprep.subr.bf16.mxu0 0
    %427 = vmatpush1.bf16.msra.mxu0 %v231
    %428 = vmatprep.subr.bf16.mxu0 0
    %429 = vmatpush1.bf16.msra.mxu0 0
    %430 = vmatprep.subr.bf16.mxu0 0
    %431 = vmatpush1.bf16.msra.mxu0 0
    %432 = vmatprep.subr.bf16.mxu0 0
    %433 = vmatpush1.bf16.msra.mxu0 0
    %434 = vmatprep.subr.bf16.mxu0 0
    %435 = vmatpush1.bf16.msra.mxu0 0
    %436 = vmatprep.subr.bf16.mxu0 0
    %437 = vmatpush1.bf16.msra.mxu0 0
    %438 = vmatprep.subr.bf16.mxu0 0
    %439 = vmatpush1.bf16.msra.mxu0 0
    %440 = vmatprep.subr.bf16.mxu0 0
    %441 = vmatpush1.bf16.msra.mxu0 0
    %442 = vmatprep.subr.bf16.mxu0 0
    %443 = vmatpush1.bf16.msra.mxu0 0
    %444 = vmatprep.mubr.bf16.mxu0 0
    %445 = vmatmul.mubr.bf16.gmra.mrb[0].mxu0 %v411
    %v446 = vpop.f32.mrb[0].mxu0
    %v447 = vadd.f32 0.0, %v446
    %v448 = vpop.f32.mrb[0].mxu0
    %v449 = vpop.f32.mrb[0].mxu0
    %v450 = vpop.f32.mrb[0].mxu0
    %451 = vdwg.mxu0
    %v452 = vadd.f32 %v161, %v447
    %v453 = vtanh.pop %v452
    %v454 = vpack.c.bf16 %v453, %v453
    %455 = vmatprep.subr.bf16.mxu0 0
    %456 = vmatpush1.bf16.msra.mxu0 %v224
    %457 = vmatprep.subr.bf16.mxu0 0
    %458 = vmatpush1.bf16.msra.mxu0 %v225
    %459 = vmatprep.subr.bf16.mxu0 0
    %460 = vmatpush1.bf16.msra.mxu0 %v226
    %461 = vmatprep.subr.bf16.mxu0 0
    %462 = vmatpush1.bf16.msra.mxu0 %v227
    %463 = vmatprep.subr.bf16.mxu0 0
    %464 = vmatpush1.bf16.msra.mxu0 %v228
    %465 = vmatprep.subr.bf16.mxu0 0
    %466 = vmatpush1.bf16.msra.mxu0 %v229
    %467 = vmatprep.subr.bf16.mxu0 0
    %468 = vmatpush1.bf16.msra.mxu0 %v230
    %469 = vmatprep.subr.bf16.mxu0 0
    %470 = vmatpush1.bf16.msra.mxu0 %v231
    %471 = vmatprep.subr.bf16.mxu0 0
    %472 = vmatpush1.bf16.msra.mxu0 0
    %473 = vmatprep.subr.bf16.mxu0 0
    %474 = vmatpush1.bf16.msra.mxu0 0
    %475 = vmatprep.subr.bf16.mxu0 0
    %476 = vmatpush1.bf16.msra.mxu0 0
    %477 = vmatprep.subr.bf16.mxu0 0
    %478 = vmatpush1.bf16.msra.mxu0 0
    %479 = vmatprep.subr.bf16.mxu0 0
    %480 = vmatpush1.bf16.msra.mxu0 0
    %481 = vmatprep.subr.bf16.mxu0 0
    %482 = vmatpush1.bf16.msra.mxu0 0
    %483 = vmatprep.subr.bf16.mxu0 0
    %484 = vmatpush1.bf16.msra.mxu0 0
    %485 = vmatprep.subr.bf16.mxu0 0
    %486 = vmatpush1.bf16.msra.mxu0 0
    %487 = vmatprep.mubr.bf16.mxu0 0
    %488 = vmatmul.mubr.bf16.gmra.mrb[0].mxu0 %v454
    %v489 = vpop.f32.mrb[0].mxu0
    %v490 = vadd.f32 0.0, %v489
    %v491 = vpop.f32.mrb[0].mxu0
    %v492 = vpop.f32.mrb[0].mxu0
    %v493 = vpop.f32.mrb[0].mxu0
    %494 = vdwg.mxu0
    %v495 = vadd.f32 %v164, %v490
    %v496 = vtanh.pop %v495
    %v497 = vpack.c.bf16 %v496, %v496
    %498 = vmatprep.subr.bf16.mxu0 0
    %499 = vmatpush1.bf16.msra.mxu0 %v224
    %500 = vmatprep.subr.bf16.mxu0 0
    %501 = vmatpush1.bf16.msra.mxu0 %v225
    %502 = vmatprep.subr.bf16.mxu0 0
    %503 = vmatpush1.bf16.msra.mxu0 %v226
    %504 = vmatprep.subr.bf16.mxu0 0
    %505 = vmatpush1.bf16.msra.mxu0 %v227
    %506 = vmatprep.subr.bf16.mxu0 0
    %507 = vmatpush1.bf16.msra.mxu0 %v228
    %508 = vmatprep.subr.bf16.mxu0 0
    %509 = vmatpush1.bf16.msra.mxu0 %v229
    %510 = vmatprep.subr.bf16.mxu0 0
    %511 = vmatpush1.bf16.msra.mxu0 %v230
    %512 = vmatprep.subr.bf16.mxu0 0
    %513 = vmatpush1.bf16.msra.mxu0 %v231
    %514 = vmatprep.subr.bf16.mxu0 0
    %515 = vmatpush1.bf16.msra.mxu0 0
    %516 = vmatprep.subr.bf16.mxu0 0
    %517 = vmatpush1.bf16.msra.mxu0 0
    %518 = vmatprep.subr.bf16.mxu0 0
    %519 = vmatpush1.bf16.msra.mxu0 0
    %520 = vmatprep.subr.bf16.mxu0 0
    %521 = vmatpush1.bf16.msra.mxu0 0
    %522 = vmatprep.subr.bf16.mxu0 0
    %523 = vmatpush1.bf16.msra.mxu0 0
    %524 = vmatprep.subr.bf16.mxu0 0
    %525 = vmatpush1.bf16.msra.mxu0 0
    %526 = vmatprep.subr.bf16.mxu0 0
    %527 = vmatpush1.bf16.msra.mxu0 0
    %528 = vmatprep.subr.bf16.mxu0 0
    %529 = vmatpush1.bf16.msra.mxu0 0
    %530 = vmatprep.mubr.bf16.mxu0 0
    %531 = vmatmul.mubr.bf16.gmra.mrb[0].mxu0 %v497
    %v532 = vpop.f32.mrb[0].mxu0
    %v533 = vadd.f32 0.0, %v532
    %v534 = vpop.f32.mrb[0].mxu0
    %v535 = vpop.f32.mrb[0].mxu0
    %v536 = vpop.f32.mrb[0].mxu0
    %537 = vdwg.mxu0
    %v538 = vadd.f32 %v169, %v533
    %v539 = vtanh.pop %v538
    %v540 = vpack.c.bf16 %v539, %v539
    %541 = vmatprep.subr.bf16.mxu0 0
    %542 = vmatpush1.bf16.msra.mxu0 %v224
    %543 = vmatprep.subr.bf16.mxu0 0
    %544 = vmatpush1.bf16.msra.mxu0 %v225
    %545 = vmatprep.subr.bf16.mxu0 0
    %546 = vmatpush1.bf16.msra.mxu0 %v226
    %547 = vmatprep.subr.bf16.mxu0 0
    %548 = vmatpush1.bf16.msra.mxu0 %v227
    %549 = vmatprep.subr.bf16.mxu0 0
    %550 = vmatpush1.bf16.msra.mxu0 %v228
    %551 = vmatprep.subr.bf16.mxu0 0
    %552 = vmatpush1.bf16.msra.mxu0 %v229
    %553 = vmatprep.subr.bf16.mxu0 0
    %554 = vmatpush1.bf16.msra.mxu0 %v230
    %555 = vmatprep.subr.bf16.mxu0 0
    %556 = vmatpush1.bf16.msra.mxu0 %v231
    %557 = vmatprep.subr.bf16.mxu0 0
    %558 = vmatpush1.bf16.msra.mxu0 0
    %559 = vmatprep.subr.bf16.mxu0 0
    %560 = vmatpush1.bf16.msra.mxu0 0
    %561 = vmatprep.subr.bf16.mxu0 0
    %562 = vmatpush1.bf16.msra.mxu0 0
    %563 = vmatprep.subr.bf16.mxu0 0
    %564 = vmatpush1.bf16.msra.mxu0 0
    %565 = vmatprep.subr.bf16.mxu0 0
    %566 = vmatpush1.bf16.msra.mxu0 0
    %567 = vmatprep.subr.bf16.mxu0 0
    %568 = vmatpush1.bf16.msra.mxu0 0
    %569 = vmatprep.subr.bf16.mxu0 0
    %570 = vmatpush1.bf16.msra.mxu0 0
    %571 = vmatprep.subr.bf16.mxu0 0
    %572 = vmatpush1.bf16.msra.mxu0 0
    %573 = vmatprep.mubr.bf16.mxu0 0
    %574 = vmatmul.mubr.bf16.gmra.mrb[0].mxu0 %v540
    %v575 = vpop.f32.mrb[0].mxu0
    %v576 = vadd.f32 0.0, %v575
    %v577 = vpop.f32.mrb[0].mxu0
    %v578 = vpop.f32.mrb[0].mxu0
    %v579 = vpop.f32.mrb[0].mxu0
    %580 = vdwg.mxu0
    %v581 = vadd.f32 %v172, %v576
    %v582 = vtanh.pop %v581
    %v583 = vpack.c.bf16 %v582, %v582
    %s584 = scalar_lea.vmem [#allocation2], 128
    %v585 = vld [vmem:[%s584] sm:$0xf]
    %v586 = vld [vmem:[%s584 + $0x4] sm:$0xf]
    %v587 = vld [vmem:[%s584 + $0x8] sm:$0xf]
    %v588 = vld [vmem:[%s584 + $0xc] sm:$0xf]
    %v589 = vld [vmem:[%s584 + $0x10] sm:$0xf]
    %v590 = vld [vmem:[%s584 + $0x14] sm:$0xf]
    %v591 = vld [vmem:[%s584 + $0x18] sm:$0xf]
    %v592 = vld [vmem:[%s584 + $0x1c] sm:$0xf]
    %v593 = vld [vmem:[%s584 + $0x20] sm:$0xf]
    %v594 = vld [vmem:[%s584 + $0x24] sm:$0xf]
    %v595 = vld [vmem:[%s584 + $0x28] sm:$0xf]
    %v596 = vld [vmem:[%s584 + $0x2c] sm:$0xf]
    %v597 = vld [vmem:[%s584 + $0x30] sm:$0xf]
    %v598 = vld [vmem:[%s584 + $0x34] sm:$0xf]
    %v599 = vld [vmem:[%s584 + $0x38] sm:$0xf]
    %v600 = vld [vmem:[%s584 + $0x3c] sm:$0xf]
    %v601 = vld [vmem:[%s2 + $0x1] sm:$0x1]
    %v602 = vlaneseq
    %v603 = vshrl.u32 %v602, 7
    %v604 = vsub.s32 0, %v603
    %v605 = vrot.slane %v601, %v604
    %v622 = vunpack.c.l.b16 %v585
    %v623 = vunpack.c.l.b16 %v586
    %v624 = vunpack.c.l.b16 %v587
    %v625 = vunpack.c.l.b16 %v588
    %v626 = vunpack.c.l.b16 %v589
    %v627 = vunpack.c.l.b16 %v590
    %v628 = vunpack.c.l.b16 %v591
    %v629 = vunpack.c.l.b16 %v592
    %v630 = vunpack.c.l.b16 %v593
    %v631 = vunpack.c.l.b16 %v594
    %v632 = vunpack.c.l.b16 %v595
    %v633 = vunpack.c.l.b16 %v596
    %v634 = vunpack.c.l.b16 %v597
    %v635 = vunpack.c.l.b16 %v598
    %v636 = vunpack.c.l.b16 %v599
    %v637 = vunpack.c.l.b16 %v600
    %v638 = vpack.c.b16 %v623, %v622
    %v639 = vpack.c.b16 %v625, %v624
    %v640 = vpack.c.b16 %v627, %v626
    %v641 = vpack.c.b16 %v629, %v628
    %v642 = vpack.c.b16 %v631, %v630
    %v643 = vpack.c.b16 %v633, %v632
    %v644 = vpack.c.b16 %v635, %v634
    %v645 = vpack.c.b16 %v637, %v636
    %654 = vmatprep.subr.bf16.mxu0 0
    %655 = vmatpush1.bf16.msra.mxu0 %v638
    %656 = vmatprep.subr.bf16.mxu0 0
    %657 = vmatpush1.bf16.msra.mxu0 %v639
    %658 = vmatprep.subr.bf16.mxu0 0
    %659 = vmatpush1.bf16.msra.mxu0 %v640
    %660 = vmatprep.subr.bf16.mxu0 0
    %661 = vmatpush1.bf16.msra.mxu0 %v641
    %662 = vmatprep.subr.bf16.mxu0 0
    %663 = vmatpush1.bf16.msra.mxu0 %v642
    %664 = vmatprep.subr.bf16.mxu0 0
    %665 = vmatpush1.bf16.msra.mxu0 %v643
    %666 = vmatprep.subr.bf16.mxu0 0
    %667 = vmatpush1.bf16.msra.mxu0 %v644
    %668 = vmatprep.subr.bf16.mxu0 0
    %669 = vmatpush1.bf16.msra.mxu0 %v645
    %670 = vmatprep.subr.bf16.mxu0 0
    %671 = vmatpush1.bf16.msra.mxu0 0
    %672 = vmatprep.subr.bf16.mxu0 0
    %673 = vmatpush1.bf16.msra.mxu0 0
    %674 = vmatprep.subr.bf16.mxu0 0
    %675 = vmatpush1.bf16.msra.mxu0 0
    %676 = vmatprep.subr.bf16.mxu0 0
    %677 = vmatpush1.bf16.msra.mxu0 0
    %678 = vmatprep.subr.bf16.mxu0 0
    %679 = vmatpush1.bf16.msra.mxu0 0
    %680 = vmatprep.subr.bf16.mxu0 0
    %681 = vmatpush1.bf16.msra.mxu0 0
    %682 = vmatprep.subr.bf16.mxu0 0
    %683 = vmatpush1.bf16.msra.mxu0 0
    %684 = vmatprep.subr.bf16.mxu0 0
    %685 = vmatpush1.bf16.msra.mxu0 0
    %686 = vmatprep.mubr.bf16.mxu0 0
    %687 = vmatmul.mubr.bf16.gmra.mrb[0].mxu0 %v583
    %v688 = vpop.f32.mrb[0].mxu0
    %v689 = vadd.f32 %v605, %v688
    %v690 = vpop.f32.mrb[0].mxu0
    %v691 = vpop.f32.mrb[0].mxu0
    %v692 = vpop.f32.mrb[0].mxu0
    %693 = vdwg.mxu0
    %vm694 = vcmp.ge.f32.partialorder %v689, 0.0
    %v695 = vmul.f32 %v689, 0.01
    %v696 = vsel %vm694, %v689, %v695
    %v697 = vpack.c.bf16 %v696, %v696
    %s698 = scalar_lea.vmem [#allocation2], 192
    %v699 = vld [vmem:[%s698] sm:$0xf]
    %v700 = vld [vmem:[%s698 + $0x4] sm:$0xf]
    %v701 = vld [vmem:[%s698 + $0x8] sm:$0xf]
    %v702 = vld [vmem:[%s698 + $0xc] sm:$0xf]
    %v703 = vld [vmem:[%s698 + $0x10] sm:$0xf]
    %v704 = vld [vmem:[%s698 + $0x14] sm:$0xf]
    %v705 = vld [vmem:[%s698 + $0x18] sm:$0xf]
    %v706 = vld [vmem:[%s698 + $0x1c] sm:$0xf]
    %v707 = vld [vmem:[%s698 + $0x20] sm:$0xf]
    %v708 = vld [vmem:[%s698 + $0x24] sm:$0xf]
    %v709 = vld [vmem:[%s698 + $0x28] sm:$0xf]
    %v710 = vld [vmem:[%s698 + $0x2c] sm:$0xf]
    %v711 = vld [vmem:[%s698 + $0x30] sm:$0xf]
    %v712 = vld [vmem:[%s698 + $0x34] sm:$0xf]
    %v713 = vld [vmem:[%s698 + $0x38] sm:$0xf]
    %v714 = vld [vmem:[%s698 + $0x3c] sm:$0xf]
    %v715 = vld [vmem:[%s2 + $0x2] sm:$0x1]
    %v716 = vlaneseq
    %v717 = vshrl.u32 %v716, 7
    %v718 = vsub.s32 0, %v717
    %v719 = vrot.slane %v715, %v718
    %v736 = vunpack.c.l.b16 %v699
    %v737 = vunpack.c.l.b16 %v700
    %v738 = vunpack.c.l.b16 %v701
    %v739 = vunpack.c.l.b16 %v702
    %v740 = vunpack.c.l.b16 %v703
    %v741 = vunpack.c.l.b16 %v704
    %v742 = vunpack.c.l.b16 %v705
    %v743 = vunpack.c.l.b16 %v706
    %v744 = vunpack.c.l.b16 %v707
    %v745 = vunpack.c.l.b16 %v708
    %v746 = vunpack.c.l.b16 %v709
    %v747 = vunpack.c.l.b16 %v710
    %v748 = vunpack.c.l.b16 %v711
    %v749 = vunpack.c.l.b16 %v712
    %v750 = vunpack.c.l.b16 %v713
    %v751 = vunpack.c.l.b16 %v714
    %v752 = vpack.c.b16 %v737, %v736
    %v753 = vpack.c.b16 %v739, %v738
    %v754 = vpack.c.b16 %v741, %v740
    %v755 = vpack.c.b16 %v743, %v742
    %v756 = vpack.c.b16 %v745, %v744
    %v757 = vpack.c.b16 %v747, %v746
    %v758 = vpack.c.b16 %v749, %v748
    %v759 = vpack.c.b16 %v751, %v750
    %768 = vmatprep.subr.bf16.mxu0 0
    %769 = vmatpush1.bf16.msra.mxu0 %v752
    %770 = vmatprep.subr.bf16.mxu0 0
    %771 = vmatpush1.bf16.msra.mxu0 %v753
    %772 = vmatprep.subr.bf16.mxu0 0
    %773 = vmatpush1.bf16.msra.mxu0 %v754
    %774 = vmatprep.subr.bf16.mxu0 0
    %775 = vmatpush1.bf16.msra.mxu0 %v755
    %776 = vmatprep.subr.bf16.mxu0 0
    %777 = vmatpush1.bf16.msra.mxu0 %v756
    %778 = vmatprep.subr.bf16.mxu0 0
    %779 = vmatpush1.bf16.msra.mxu0 %v757
    %780 = vmatprep.subr.bf16.mxu0 0
    %781 = vmatpush1.bf16.msra.mxu0 %v758
    %782 = vmatprep.subr.bf16.mxu0 0
    %783 = vmatpush1.bf16.msra.mxu0 %v759
    %784 = vmatprep.subr.bf16.mxu0 0
    %785 = vmatpush1.bf16.msra.mxu0 0
    %786 = vmatprep.subr.bf16.mxu0 0
    %787 = vmatpush1.bf16.msra.mxu0 0
    %788 = vmatprep.subr.bf16.mxu0 0
    %789 = vmatpush1.bf16.msra.mxu0 0
    %790 = vmatprep.subr.bf16.mxu0 0
    %791 = vmatpush1.bf16.msra.mxu0 0
    %792 = vmatprep.subr.bf16.mxu0 0
    %793 = vmatpush1.bf16.msra.mxu0 0
    %794 = vmatprep.subr.bf16.mxu0 0
    %795 = vmatpush1.bf16.msra.mxu0 0
    %796 = vmatprep.subr.bf16.mxu0 0
    %797 = vmatpush1.bf16.msra.mxu0 0
    %798 = vmatprep.subr.bf16.mxu0 0
    %799 = vmatpush1.bf16.msra.mxu0 0
    %800 = vmatprep.mubr.bf16.mxu0 0
    %801 = vmatmul.mubr.bf16.gmra.mrb[0].mxu0 %v697
    %v802 = vpop.f32.mrb[0].mxu0
    %v803 = vadd.f32 %v719, %v802
    %v804 = vpop.f32.mrb[0].mxu0
    %v805 = vpop.f32.mrb[0].mxu0
    %v806 = vpop.f32.mrb[0].mxu0
    %807 = vdwg.mxu0
    %vm808 = vcmp.ge.f32.partialorder %v803, 0.0
    %v809 = vmul.f32 %v803, 0.01
    %v810 = vsel %vm808, %v803, %v809
    %v811 = vpack.c.bf16 %v810, %v810
    %s812 = scalar_lea.vmem [#allocation2], 256
    %v813 = vld [vmem:[%s812] sm:$0xf]
    %v814 = vld [vmem:[%s812 + $0x4] sm:$0xf]
    %v815 = vld [vmem:[%s812 + $0x8] sm:$0xf]
    %v816 = vld [vmem:[%s812 + $0xc] sm:$0xf]
    %v817 = vld [vmem:[%s812 + $0x10] sm:$0xf]
    %v818 = vld [vmem:[%s812 + $0x14] sm:$0xf]
    %v819 = vld [vmem:[%s812 + $0x18] sm:$0xf]
    %v820 = vld [vmem:[%s812 + $0x1c] sm:$0xf]
    %v821 = vld [vmem:[%s812 + $0x20] sm:$0xf]
    %v822 = vld [vmem:[%s812 + $0x24] sm:$0xf]
    %v823 = vld [vmem:[%s812 + $0x28] sm:$0xf]
    %v824 = vld [vmem:[%s812 + $0x2c] sm:$0xf]
    %v825 = vld [vmem:[%s812 + $0x30] sm:$0xf]
    %v826 = vld [vmem:[%s812 + $0x34] sm:$0xf]
    %v827 = vld [vmem:[%s812 + $0x38] sm:$0xf]
    %v828 = vld [vmem:[%s812 + $0x3c] sm:$0xf]
    %v829 = vld [vmem:[%s2 + $0x3] sm:$0x1]
    %v830 = vlaneseq
    %v831 = vshrl.u32 %v830, 7
    %v832 = vsub.s32 0, %v831
    %v833 = vrot.slane %v829, %v832
    %v850 = vunpack.c.l.b16 %v813
    %v851 = vunpack.c.l.b16 %v814
    %v852 = vunpack.c.l.b16 %v815
    %v853 = vunpack.c.l.b16 %v816
    %v854 = vunpack.c.l.b16 %v817
    %v855 = vunpack.c.l.b16 %v818
    %v856 = vunpack.c.l.b16 %v819
    %v857 = vunpack.c.l.b16 %v820
    %v858 = vunpack.c.l.b16 %v821
    %v859 = vunpack.c.l.b16 %v822
    %v860 = vunpack.c.l.b16 %v823
    %v861 = vunpack.c.l.b16 %v824
    %v862 = vunpack.c.l.b16 %v825
    %v863 = vunpack.c.l.b16 %v826
    %v864 = vunpack.c.l.b16 %v827
    %v865 = vunpack.c.l.b16 %v828
    %v866 = vpack.c.b16 %v851, %v850
    %v867 = vpack.c.b16 %v853, %v852
    %v868 = vpack.c.b16 %v855, %v854
    %v869 = vpack.c.b16 %v857, %v856
    %v870 = vpack.c.b16 %v859, %v858
    %v871 = vpack.c.b16 %v861, %v860
    %v872 = vpack.c.b16 %v863, %v862
    %v873 = vpack.c.b16 %v865, %v864
    %882 = vmatprep.subr.bf16.mxu0 0
    %883 = vmatpush1.bf16.msra.mxu0 %v866
    %884 = vmatprep.subr.bf16.mxu0 0
    %885 = vmatpush1.bf16.msra.mxu0 %v867
    %886 = vmatprep.subr.bf16.mxu0 0
    %887 = vmatpush1.bf16.msra.mxu0 %v868
    %888 = vmatprep.subr.bf16.mxu0 0
    %889 = vmatpush1.bf16.msra.mxu0 %v869
    %890 = vmatprep.subr.bf16.mxu0 0
    %891 = vmatpush1.bf16.msra.mxu0 %v870
    %892 = vmatprep.subr.bf16.mxu0 0
    %893 = vmatpush1.bf16.msra.mxu0 %v871
    %894 = vmatprep.subr.bf16.mxu0 0
    %895 = vmatpush1.bf16.msra.mxu0 %v872
    %896 = vmatprep.subr.bf16.mxu0 0
    %897 = vmatpush1.bf16.msra.mxu0 %v873
    %898 = vmatprep.subr.bf16.mxu0 0
    %899 = vmatpush1.bf16.msra.mxu0 0
    %900 = vmatprep.subr.bf16.mxu0 0
    %901 = vmatpush1.bf16.msra.mxu0 0
    %902 = vmatprep.subr.bf16.mxu0 0
    %903 = vmatpush1.bf16.msra.mxu0 0
    %904 = vmatprep.subr.bf16.mxu0 0
    %905 = vmatpush1.bf16.msra.mxu0 0
    %906 = vmatprep.subr.bf16.mxu0 0
    %907 = vmatpush1.bf16.msra.mxu0 0
    %908 = vmatprep.subr.bf16.mxu0 0
    %909 = vmatpush1.bf16.msra.mxu0 0
    %910 = vmatprep.subr.bf16.mxu0 0
    %911 = vmatpush1.bf16.msra.mxu0 0
    %912 = vmatprep.subr.bf16.mxu0 0
    %913 = vmatpush1.bf16.msra.mxu0 0
    %914 = vmatprep.mubr.bf16.mxu0 0
    %915 = vmatmul.mubr.bf16.gmra.mrb[0].mxu0 %v811
    %v916 = vpop.f32.mrb[0].mxu0
    %v917 = vadd.f32 %v833, %v916
    %v918 = vpop.f32.mrb[0].mxu0
    %v919 = vpop.f32.mrb[0].mxu0
    %v920 = vpop.f32.mrb[0].mxu0
    %921 = vdwg.mxu0
    %vm922 = vcmp.ge.f32.partialorder %v917, 0.0
    %v923 = vmul.f32 %v917, 0.01
    %v924 = vsel %vm922, %v917, %v923
    %v925 = vlaneseq
    %v926 = vand.u32 %v925, 127
    %vm927 = vcmp.lt.s32.totalorder %v926, 8
    %v928 = vsel %vm927, %v924, -1e+30
    %929 = vmax.xlane.f32.xlu0 %v928
    %v930 = vpop.xlane.xlu0 %929
    %v931 = vsub.f32 %v928, %v930
    %v932 = vmul.f32 %v931, 1.442695
    %v933 = vpow.pop %v932
    %934 = vadd.xlane.f32.xlu0 %v933
    %v935 = vpop.xlane.xlu0 %934
    %v936 = vlog2.pop %v935
    %v937 = vmul.f32 %v936, 0.6931472
    %v938 = vsub.f32 %v931, %v937
    %939 = vst [vmem:[%s3] sm:$0xff] %v938
    // Predicated region
    $region18: #{fwd.1} parent=1 // pred_check
      _
    $region19: #{fwd.1} parent=1 // pred_check_branch
      %941 = sbr.rel (0) target = $region21
    $region20: #{fwd.1} parent=1 // pred_region
      _
    $region21: #{fwd.1} parent=1 // pred_fallthru
      _
    // Predicated region
    $region22: #{fwd.1} parent=1 // pred_check
      _
    $region23: #{fwd.1} parent=1 // pred_check_branch
      %943 = sbr.rel (0) target = $region25
    $region24: #{fwd.1} parent=1 // pred_region
      _
    $region25: #{fwd.1} parent=1 // pred_fallthru
      _
    %944 = vsyncpa [#allocation3], 1

</llo_original>
